<compile_context>
chip_gen: v6e
topology: v6e:2x2x1
jax: 0.10.0
libtpu: 0.0.40
codegen_flags: <defaults>
</compile_context>

<pallas_src>
import functools

import jax
import jax.numpy as jnp
from jax.experimental import pallas as pl
from jax.experimental.pallas import tpu as pltpu

_LANE = 128


def _round_up(x, m):
    return ((x + m - 1) // m) * m


def _tile_rows(n_rows, tm):
    """Pick the row tile. Multi-tile blocks are lane/sublane aligned (mult. of
    128); a single tile uses the exact row count (block == array, always legal).
    Clamp so the 'parallel' axis has ~>=4 tiles (feeds both v7x TensorCores)."""
    tm_hint = max(_LANE, (tm // _LANE) * _LANE)
    tm_eff = min(tm_hint, _round_up(pl.cdiv(n_rows, 4), _LANE))
    if tm_eff >= n_rows:
        return n_rows, 1
    return tm_eff, pl.cdiv(n_rows, tm_eff)


def _vq_kernel(x_ref, e_ref, e2_ref, q_ref, idx_ref, sse_ref, *,
               num_embeddings, valid_rows, needs_mask):
    """One row-tile of the VQ forward.

    x_ref  : (TM, D)        flat inputs tile (last tile may hold garbage rows)
    e_ref  : (K, D)         full codebook (resident across grid steps)
    e2_ref : (1, K)         ||e||^2 per code (resident, precomputed)
    q_ref  : (TM, D)        quantized outputs tile
    idx_ref: (1, 1, TM)     lane-dense per-row code indices (int32)
    sse_ref: (1, 1, D)      per-tile partial sum of squared error (row-reduced)
    """
    x = x_ref[...].astype(jnp.float32)                           # (TM, D)
    tm = x.shape[0]

    # Reduced "distance": ||e||^2 - 2 x.e  (per-row ||x||^2 is constant along
    # the codebook axis, so the argmin is unchanged; `d` is NOT a true
    # squared distance). trans_b contraction -> no resident e^T copy needed.
    xe = jax.lax.dot_general(x, e_ref[...],
                             dimension_numbers=(((1,), (1,)), ((), ())),
                             preferred_element_type=jnp.float32)  # (TM, K)
    d = e2_ref[...] - 2.0 * xe

    # argmin over the codebook axis (first occurrence, like torch.argmin)
    dmin = jnp.min(d, axis=1, keepdims=True)                     # (TM, 1)
    iota = jax.lax.broadcasted_iota(jnp.int32, d.shape, 1)       # (TM, K)
    idx = jnp.min(jnp.where(d == dmin, iota, num_embeddings),
                  axis=1, keepdims=True)                         # (TM, 1)

    # one-hot (kernel-internal only) and codebook lookup via MXU matmul
    enc = (iota == idx).astype(jnp.float32)                      # (TM, K)
    q = jnp.dot(enc, e_ref[...], preferred_element_type=jnp.float32)  # (TM, D)
    q_ref[...] = q.astype(q_ref.dtype)

    # Lane-dense per-row indices: one-hot . [0..K-1] gives an exact (1, TM)
    # float row (tiny MXU matmul doubles as the (TM,1)->(1,TM) relayout).
    codes = jax.lax.broadcasted_iota(
        jnp.int32, (1, num_embeddings), 1).astype(jnp.float32)   # (1, K)
    idx_lane = jax.lax.dot_general(codes, enc,
                                   dimension_numbers=(((1,), (1,)), ((), ())),
                                   preferred_element_type=jnp.float32)  # (1, TM)
    idx_ref[...] = idx_lane[None].astype(jnp.int32)              # (1, 1, TM)

    # Per-tile partial SSE, reduced over rows only -> lane-dense (1, D) store.
    # Full reduction finishes in JAX, keeping the grid axis "parallel".
    err2 = (q - x) * (q - x)
    if needs_mask:  # only when N % tm != 0: zero the garbage edge rows
        row = (pl.program_id(0) * tm
               + jax.lax.broadcasted_iota(jnp.int32, (tm, 1), 0))
        err2 = jnp.where(row < valid_rows, err2, 0.0)
    sse_ref[...] = jnp.sum(err2, axis=0, keepdims=True)[None]    # (1, 1, D)


def vector_quantizer_ema_forward(inputs, embedding_weight,
                                 commitment_cost=0.25, tm=2048):
    """inputs: (..., D), embedding_weight: (K, D)."""
    input_shape = inputs.shape
    K, D = embedding_weight.shape
    flat = inputs.reshape(-1, D)
    N = flat.shape[0]

    tm_eff, num_tiles = _tile_rows(N, tm)
    needs_mask = (N % tm_eff) != 0   # ragged last tile -> mask its SSE rows

    # Hoisted codebook constants (computed once, tiny, resident in VMEM).
    e32 = embedding_weight.astype(jnp.float32)
    e2 = jnp.sum(e32 * e32, axis=1)[None, :]      # (1, K)

    kernel = functools.partial(_vq_kernel, num_embeddings=K,
                               valid_rows=N, needs_mask=needs_mask)

    q_flat, idx_tiles, sse_parts = pl.pallas_call(
        kernel,
        out_shape=(
            jax.ShapeDtypeStruct((N, D), inputs.dtype),
            jax.ShapeDtypeStruct((num_tiles, 1, tm_eff), jnp.int32),
            jax.ShapeDtypeStruct((num_tiles, 1, D), jnp.float32),
        ),
        grid_spec=pltpu.PrefetchScalarGridSpec(
            num_scalar_prefetch=0,
            grid=(num_tiles,),
            in_specs=[
                pl.BlockSpec((tm_eff, D), lambda i: (i, 0)),   # inputs tile
                # constant block index -> Pallas keeps these resident (16 KiB)
                pl.BlockSpec((K, D), lambda i: (0, 0)),        # codebook
                pl.BlockSpec((1, K), lambda i: (0, 0)),        # ||e||^2
            ],
            out_specs=[
                pl.BlockSpec((tm_eff, D), lambda i: (i, 0)),        # quantized
                pl.BlockSpec((1, 1, tm_eff), lambda i: (i, 0, 0)),  # indices
                pl.BlockSpec((1, 1, D), lambda i: (i, 0, 0)),       # partial SSE
            ],
        ),
        compiler_params=pltpu.CompilerParams(
            dimension_semantics=("parallel",)),   # no cross-step carry
    )(flat, e32, e2)

    quantized = q_flat.reshape(input_shape)

    # Rebuild the (N, K) float32 one-hot from the lane-dense indices in the
    # wrapper (kernel no longer does masked K=32 stores). The int32 slice for
    # the ragged case is ~0.4% of total traffic.
    idx_flat = idx_tiles.reshape(num_tiles * tm_eff)
    if num_tiles * tm_eff != N:
        idx_flat = idx_flat[:N]
    encodings = (idx_flat[:, None]
                 == jnp.arange(K, dtype=jnp.int32)[None, :]).astype(jnp.float32)

    # F.mse_loss(quantized.detach(), inputs) with mean reduction
    e_latent_loss = jnp.sum(sse_parts) / jnp.float32(N * D)
    loss = commitment_cost * e_latent_loss
    # straight-through: forward value is just `quantized`
    return quantized, loss, encodings


def _reference(x, w, commitment_cost):
    flat = x.reshape(-1, w.shape[1]).astype(jnp.float32)
    dist = (jnp.sum(flat ** 2, axis=1, keepdims=True)
            + jnp.sum(w ** 2, axis=1)
            - 2.0 * flat @ w.T)
    idx = jnp.argmin(dist, axis=1)
    enc = jax.nn.one_hot(idx, w.shape[0], dtype=jnp.float32)
    q = (enc @ w).reshape(x.shape)
    loss = commitment_cost * jnp.mean((q - x) ** 2)
    return q, loss, enc


if __name__ == "__main__":
    # Module defaults: embedding_dim = num_hiddens = 128, num_embeddings = groups = 32
    num_hiddens = 128
    groups = 32
    commitment_cost = 0.25

    key = jax.random.PRNGKey(0)
    k_emb, k_in1, k_in2 = jax.random.split(key, 3)

    # deterministic "normal_()" initialized codebook
    embedding_weight = jax.random.normal(k_emb, (groups, num_hiddens), jnp.float32)

    # --- check 1: NHWC input, batch=2, spatial=8x8, channels=128 -> N=128 rows
    # (single full-array tile)
    x1 = jax.random.normal(k_in1, (2, 8, 8, num_hiddens), jnp.float32)
    q1, l1, e1 = vector_quantizer_ema_forward(
        x1, embedding_weight, commitment_cost=commitment_cost)
    jax.block_until_ready((q1, l1, e1))
    qr, lr, er = _reference(x1, embedding_weight, commitment_cost)
    assert q1.shape == x1.shape and e1.shape == (128, groups)
    assert jnp.allclose(q1, qr, atol=1e-5, rtol=1e-5)
    assert jnp.allclose(e1, er)
    assert jnp.allclose(l1, lr, atol=1e-6, rtol=1e-5)

    # --- check 2: ragged row count (N = 2*10*15 = 300) with tm=128 -> 3 tiles,
    # exercises the multi-tile parallel grid, the partial edge block (44 valid
    # rows: OOB reads masked out of the SSE, OOB writes dropped) and the
    # index-slice path.
    x2 = jax.random.normal(k_in2, (2, 10, 15, num_hiddens), jnp.float32)
    q2, l2, e2_ = vector_quantizer_ema_forward(
        x2, embedding_weight, commitment_cost=commitment_cost, tm=128)
    jax.block_until_ready((q2, l2, e2_))
    qr2, lr2, er2 = _reference(x2, embedding_weight, commitment_cost)
    assert jnp.allclose(q2, qr2, atol=1e-5, rtol=1e-5)
    assert jnp.allclose(e2_, er2)
    assert jnp.allclose(l2, lr2, atol=1e-6, rtol=1e-5)

    print("KERNEL_OK")
</pallas_src>

<mosaic_0001>
module attributes {stable_mosaic.version = 11 : i64} {
  func.func @_vq_kernel(%arg0: i32, %arg1: memref<128x128xf32, #tpu.memory_space<vmem>>, %arg2: memref<32x128xf32, #tpu.memory_space<vmem>>, %arg3: memref<1x32xf32, #tpu.memory_space<vmem>>, %arg4: memref<128x128xf32, #tpu.memory_space<vmem>>, %arg5: memref<1x1x128xi32, #tpu.memory_space<vmem>>, %arg6: memref<1x1x128xf32, #tpu.memory_space<vmem>>) attributes {dimension_semantics = [#tpu.dimension_semantics<parallel>], iteration_bounds = array<i64: 1>, scalar_prefetch = 0 : i64, scratch_operands = 0 : i64, tpu.core_type = #tpu.core_type<tc>, window_params = [{transform_indices = @transform_0, window_bounds = array<i64: 128, 128>}, {pipeline_mode = #tpu.pipeline_mode<synchronous>, transform_indices = @transform_1, window_bounds = array<i64: 32, 128>}, {pipeline_mode = #tpu.pipeline_mode<synchronous>, transform_indices = @transform_2, window_bounds = array<i64: 1, 32>}, {transform_indices = @transform_3, window_bounds = array<i64: 128, 128>}, {transform_indices = @transform_4, window_bounds = array<i64: 1, 1, 128>}, {transform_indices = @transform_5, window_bounds = array<i64: 1, 1, 128>}]} {
    %c0 = arith.constant 0 : index
    %c0_0 = arith.constant 0 : index
    %0 = vector.load %arg1[%c0, %c0_0] : memref<128x128xf32, #tpu.memory_space<vmem>>, vector<128x128xf32>
    %c0_1 = arith.constant 0 : index
    %c0_2 = arith.constant 0 : index
    %1 = vector.load %arg2[%c0_1, %c0_2] : memref<32x128xf32, #tpu.memory_space<vmem>>, vector<32x128xf32>
    %cst = arith.constant dense<0.000000e+00> : vector<128x32xf32>
    %2 = tpu.matmul %0, %1, %cst {dimension_numbers = #tpu.dot_dimension_numbers<[1], [1], [0], [0], [0, 0, 1, 0], [], []>} : vector<128x128xf32>, vector<32x128xf32>, vector<128x32xf32> -> vector<128x32xf32>
    %c0_3 = arith.constant 0 : index
    %c0_4 = arith.constant 0 : index
    %3 = vector.load %arg3[%c0_3, %c0_4] : memref<1x32xf32, #tpu.memory_space<vmem>>, vector<1x32xf32>
    %cst_5 = arith.constant 2.000000e+00 : f32
    %4 = vector.broadcast %cst_5 : f32 to vector<128x32xf32>
    %5 = arith.mulf %4, %2 : vector<128x32xf32>
    %6 = vector.broadcast %3 : vector<1x32xf32> to vector<128x32xf32>
    %7 = arith.subf %6, %5 : vector<128x32xf32>
    %cst_6 = arith.constant dense<0x7F800000> : vector<128xf32>
    %8 = vector.multi_reduction <minimumf>, %7, %cst_6 [1] : vector<128x32xf32> to vector<128xf32>
    %9 = vector.shape_cast %8 : vector<128xf32> to vector<128x1xf32>
    %10 = tpu.iota {dimensions = array<i32: 1>} : vector<128x32xi32>
    %11 = vector.broadcast %9 : vector<128x1xf32> to vector<128x32xf32>
    %12 = arith.cmpf oeq, %7, %11 : vector<128x32xf32>
    %c32_i32 = arith.constant 32 : i32
    %13 = vector.broadcast %c32_i32 : i32 to vector<128x32xi32>
    %14 = arith.select %12, %10, %13 : vector<128x32xi1>, vector<128x32xi32>
    %cst_7 = arith.constant dense<2147483647> : vector<128xi32>
    %15 = vector.multi_reduction <minsi>, %14, %cst_7 [1] : vector<128x32xi32> to vector<128xi32>
    %16 = vector.shape_cast %15 : vector<128xi32> to vector<128x1xi32>
    %17 = vector.broadcast %16 : vector<128x1xi32> to vector<128x32xi32>
    %18 = arith.cmpi eq, %10, %17 : vector<128x32xi32>
    %19 = arith.extui %18 : vector<128x32xi1> to vector<128x32xi32>
    %20 = arith.sitofp %19 : vector<128x32xi32> to vector<128x32xf32>
    %c0_8 = arith.constant 0 : index
    %c0_9 = arith.constant 0 : index
    %21 = vector.load %arg2[%c0_8, %c0_9] : memref<32x128xf32, #tpu.memory_space<vmem>>, vector<32x128xf32>
    %cst_10 = arith.constant dense<0.000000e+00> : vector<128x128xf32>
    %22 = tpu.matmul %20, %21, %cst_10 {dimension_numbers = #tpu.dot_dimension_numbers<[1], [0], [0], [1], [0, 0, 1, 1], [], []>} : vector<128x32xf32>, vector<32x128xf32>, vector<128x128xf32> -> vector<128x128xf32>
    %c0_11 = arith.constant 0 : index
    %c0_12 = arith.constant 0 : index
    %23 = vector.load %arg4[%c0_11, %c0_12] : memref<128x128xf32, #tpu.memory_space<vmem>>, vector<128x128xf32>
    tpu.vector_store %arg4[%c0_11, %c0_12], %22 {strides = array<i32>} : memref<128x128xf32, #tpu.memory_space<vmem>>, vector<128x128xf32>,
    %24 = tpu.iota {dimensions = array<i32: 1>} : vector<1x32xi32>
    %25 = arith.sitofp %24 : vector<1x32xi32> to vector<1x32xf32>
    %cst_13 = arith.constant dense<0.000000e+00> : vector<1x128xf32>
    %26 = tpu.matmul %25, %20, %cst_13 {dimension_numbers = #tpu.dot_dimension_numbers<[1], [1], [0], [0], [0, 0, 1, 0], [], []>} : vector<1x32xf32>, vector<128x32xf32>, vector<1x128xf32> -> vector<1x128xf32>
    %27 = vector.shape_cast %26 : vector<1x128xf32> to vector<1x1x128xf32>
    %28 = arith.fptosi %27 : vector<1x1x128xf32> to vector<1x1x128xi32>
    %c0_14 = arith.constant 0 : index
    %c0_15 = arith.constant 0 : index
    %c0_16 = arith.constant 0 : index
    %29 = vector.load %arg5[%c0_14, %c0_15, %c0_16] : memref<1x1x128xi32, #tpu.memory_space<vmem>>, vector<1x1x128xi32>
    tpu.vector_store %arg5[%c0_14, %c0_15, %c0_16], %28 {strides = array<i32>} : memref<1x1x128xi32, #tpu.memory_space<vmem>>, vector<1x1x128xi32>,
    %30 = arith.subf %22, %0 : vector<128x128xf32>
    %31 = arith.subf %22, %0 : vector<128x128xf32>
    %32 = arith.mulf %30, %31 : vector<128x128xf32>
    %cst_17 = arith.constant dense<0.000000e+00> : vector<128xf32>
    %33 = vector.multi_reduction <add>, %32, %cst_17 [0] : vector<128x128xf32> to vector<128xf32>
    %34 = vector.shape_cast %33 : vector<128xf32> to vector<1x128xf32>
    %35 = vector.shape_cast %34 : vector<1x128xf32> to vector<1x1x128xf32>
    %c0_18 = arith.constant 0 : index
    %c0_19 = arith.constant 0 : index
    %c0_20 = arith.constant 0 : index
    %36 = vector.load %arg6[%c0_18, %c0_19, %c0_20] : memref<1x1x128xf32, #tpu.memory_space<vmem>>, vector<1x1x128xf32>
    tpu.vector_store %arg6[%c0_18, %c0_19, %c0_20], %35 {strides = array<i32>} : memref<1x1x128xf32, #tpu.memory_space<vmem>>, vector<1x1x128xf32>,
    return
  }
  func.func @transform_0(%arg0: i32) -> (i32, i32) {
    %c0_i32 = arith.constant 0 : i32
    %c0_i32_0 = arith.constant 0 : i32
    return %arg0, %c0_i32 : i32, i32
  }
  func.func @transform_1(%arg0: i32) -> (i32, i32) {
    %c0_i32 = arith.constant 0 : i32
    %c0_i32_0 = arith.constant 0 : i32
    %c0_i32_1 = arith.constant 0 : i32
    return %c0_i32, %c0_i32_0 : i32, i32
  }
  func.func @transform_2(%arg0: i32) -> (i32, i32) {
    %c0_i32 = arith.constant 0 : i32
    %c0_i32_0 = arith.constant 0 : i32
    %c0_i32_1 = arith.constant 0 : i32
    return %c0_i32, %c0_i32_0 : i32, i32
  }
  func.func @transform_3(%arg0: i32) -> (i32, i32) {
    %c0_i32 = arith.constant 0 : i32
    %c0_i32_0 = arith.constant 0 : i32
    return %arg0, %c0_i32 : i32, i32
  }
  func.func @transform_4(%arg0: i32) -> (i32, i32, i32) {
    %c0_i32 = arith.constant 0 : i32
    %c0_i32_0 = arith.constant 0 : i32
    %c0_i32_1 = arith.constant 0 : i32
    return %arg0, %c0_i32, %c0_i32_0 : i32, i32, i32
  }
  func.func @transform_5(%arg0: i32) -> (i32, i32, i32) {
    %c0_i32 = arith.constant 0 : i32
    %c0_i32_0 = arith.constant 0 : i32
    %c0_i32_1 = arith.constant 0 : i32
    return %arg0, %c0_i32, %c0_i32_0 : i32, i32, i32
  }
}

</mosaic_0001>

<llo_original>
// kernel: tpu_custom_call.1
$region0: #{tpu_custom_call.1}
  #allocation0 [shape = 'u32[]', space=smem, size = 0x4, offset = 0x4, fixed_abs, tag = 'smem constant byte address 0x4 - core index']
  #allocation1 [shape = 'u32[144,128]{1,0:T(1,128)}', space=vmem, size = 0x12000, scoped, tag = 'internal scratch']
  %s0 = inlined_call_operand.hbm [shape: f32[128,128], index: 0, kind: input, shape index: {}]
  %s1 = inlined_call_operand.hbm [shape: f32[32,128], index: 1, kind: input, shape index: {}]
  %s2 = inlined_call_operand.vmem [shape: f32[1,32], index: 2, kind: input, shape index: {}]
  %s3 = inlined_call_operand.hbm [shape: f32[128,128], index: 3, kind: output, shape index: {0}]
  %s4 = inlined_call_operand.hbm [shape: s32[1,1,128], index: 4, kind: output, shape index: {1}]
  %s5 = inlined_call_operand.hbm [shape: f32[1,1,128], index: 5, kind: output, shape index: {2}]
  %6 = xla_tuple %s3, %s4, %s5
  %s7 = sld [smem:[#allocation0]]
  $region46: #{tpu_custom_call.1} parent=0
    _
  %s9 = ssub.s32 1, %s7
  %s10 = scalar_select 0, %s9, %s7
  $region1: #{tpu_custom_call.1} parent=0
    #allocation2 [shape = 'u8[65536]{0}', space=vmem, size = 0x10000, scoped, tag = 'input window, operand 0, single buffered']
    #allocation3 [shape = 's32[1]{0}', space=sflag, size = 0x4, scoped, tag = 'scoped memory for tpu_custom_call.1']
    #allocation4 [shape = 's32[1]{0}', space=sflag, size = 0x4, scoped, tag = 'scoped memory for tpu_custom_call.1']
    #allocation5 [shape = 'u8[16384]{0}', space=vmem, size = 0x4000, scoped, tag = 'input window, operand 1, single buffered']
    #allocation6 [shape = 's32[1]{0}', space=sflag, size = 0x4, scoped, tag = 'scoped memory for tpu_custom_call.1']
    #allocation7 [shape = 'u8[65536]{0}', space=vmem, size = 0x10000, scoped, tag = 'output window, operand 0, single buffered']
    #allocation8 [shape = 'u8[512]{0}', space=vmem, size = 0x400, scoped, tag = 'output window, operand 1, single buffered']
    #allocation9 [shape = 's32[1]{0}', space=sflag, size = 0x4, scoped, tag = 'scoped memory for tpu_custom_call.1']
    #allocation10 [shape = 'u8[512]{0}', space=vmem, size = 0x400, scoped, tag = 'output window, operand 2, single buffered']
    %11 = vsyncpa [#allocation3], 0
    %12 = vsyncpa [#allocation6], 0
    %13 = vsyncpa [#allocation4], 0
    %14 = vsyncpa [#allocation9], 0
    // Predicated region
    $region2: #{tpu_custom_call.1} parent=1 // pred_check
      _
    $region3: #{tpu_custom_call.1} parent=1 // pred_check_branch
      %16 = sbr.rel (0) target = $region5
    $region4: #{tpu_custom_call.1} parent=1 // pred_region
      %s18 = ssub.s32 2048, 2048
      %19 = vsyncadd [#allocation3], %s18
      %s20 = sshll.u32 [#allocation2], 4
      %s21 = int_to_ptr.vmem [resolvable:$true] %s20
      %26 = dma.hbm_to_vmem [thread:$0]  %s0, 2048, %s21, [#allocation3], 128, 128, 8
    $region5: #{tpu_custom_call.1} parent=1 // pred_fallthru
      _
    // Predicated region
    $region6: #{tpu_custom_call.1} parent=1 // pred_check
      _
    $region7: #{tpu_custom_call.1} parent=1 // pred_check_branch
      %28 = sbr.rel (0) target = $region9
    $region8: #{tpu_custom_call.1} parent=1 // pred_region
      %s30 = ssub.s32 512, 512
      %31 = vsyncadd [#allocation6], %s30
      %s32 = sshll.u32 [#allocation5], 4
      %s33 = int_to_ptr.vmem [resolvable:$true] %s32
      %38 = dma.hbm_to_vmem [thread:$0]  %s1, 512, %s33, [#allocation6], 128, 128, 8
    $region9: #{tpu_custom_call.1} parent=1 // pred_fallthru
      _
    // Predicated region
    $region10: #{tpu_custom_call.1} parent=1 // pred_check
      _
    $region11: #{tpu_custom_call.1} parent=1 // pred_check_branch
      %40 = sbr.rel (0) target = $region13
    $region12: #{tpu_custom_call.1} parent=1 // pred_region
      _
    $region13: #{tpu_custom_call.1} parent=1 // pred_fallthru
      _
    // Predicated region
    $region14: #{tpu_custom_call.1} parent=1 // pred_check
      _
    $region15: #{tpu_custom_call.1} parent=1 // pred_check_branch
      %42 = sbr.rel (0) target = $region17
    $region16: #{tpu_custom_call.1} parent=1 // pred_region
      %43 = dma.done [#allocation3], 2048
    $region17: #{tpu_custom_call.1} parent=1 // pred_fallthru
      _
    // Predicated region
    $region18: #{tpu_custom_call.1} parent=1 // pred_check
      _
    $region19: #{tpu_custom_call.1} parent=1 // pred_check_branch
      %45 = sbr.rel (0) target = $region21
    $region20: #{tpu_custom_call.1} parent=1 // pred_region
      %46 = dma.done [#allocation6], 512
    $region21: #{tpu_custom_call.1} parent=1 // pred_fallthru
      _
    %v47 = vld [vmem:[#allocation2] sm:$0xff]
    %v48 = vld [vmem:[#allocation2 + $0x8] sm:$0xff]
    %v49 = vld [vmem:[#allocation2 + $0x10] sm:$0xff]
    %v50 = vld [vmem:[#allocation2 + $0x18] sm:$0xff]
    %v51 = vld [vmem:[#allocation2 + $0x20] sm:$0xff]
    %v52 = vld [vmem:[#allocation2 + $0x28] sm:$0xff]
    %v53 = vld [vmem:[#allocation2 + $0x30] sm:$0xff]
    %v54 = vld [vmem:[#allocation2 + $0x38] sm:$0xff]
    %v55 = vld [vmem:[#allocation2 + $0x40] sm:$0xff]
    %v56 = vld [vmem:[#allocation2 + $0x48] sm:$0xff]
    %v57 = vld [vmem:[#allocation2 + $0x50] sm:$0xff]
    %v58 = vld [vmem:[#allocation2 + $0x58] sm:$0xff]
    %v59 = vld [vmem:[#allocation2 + $0x60] sm:$0xff]
    %v60 = vld [vmem:[#allocation2 + $0x68] sm:$0xff]
    %v61 = vld [vmem:[#allocation2 + $0x70] sm:$0xff]
    %v62 = vld [vmem:[#allocation2 + $0x78] sm:$0xff]
    %v63 = vld [vmem:[#allocation5] sm:$0xff]
    %v64 = vld [vmem:[#allocation5 + $0x8] sm:$0xff]
    %v65 = vld [vmem:[#allocation5 + $0x10] sm:$0xff]
    %v66 = vld [vmem:[#allocation5 + $0x18] sm:$0xff]
    %67 = vmatprep.subr.mxu0 0.0
    %68 = vmatpush1.xpose.msra.mxu0 0.0
    %69 = vmatprep.subr.mxu0 0.0
    %70 = vmatpush1.xpose.msra.mxu0 0.0
    %71 = vmatprep.subr.mxu0 0.0
    %72 = vmatpush1.xpose.msra.mxu0 0.0
    %73 = vmatprep.subr.mxu0 0.0
    %74 = vmatpush1.xpose.msra.mxu0 0.0
    %75 = vmatprep.subr.mxu0 0.0
    %76 = vmatpush1.xpose.msra.mxu0 0.0
    %77 = vmatprep.subr.mxu0 0.0
    %78 = vmatpush1.xpose.msra.mxu0 0.0
    %79 = vmatprep.subr.mxu0 0.0
    %80 = vmatpush1.xpose.msra.mxu0 0.0
    %81 = vmatprep.subr.mxu0 0.0
    %82 = vmatpush1.xpose.msra.mxu0 0.0
    %83 = vmatprep.subr.mxu0 0.0
    %84 = vmatpush1.xpose.msra.mxu0 0.0
    %85 = vmatprep.subr.mxu0 0.0
    %86 = vmatpush1.xpose.msra.mxu0 0.0
    %87 = vmatprep.subr.mxu0 0.0
    %88 = vmatpush1.xpose.msra.mxu0 0.0
    %89 = vmatprep.subr.mxu0 0.0
    %90 = vmatpush1.xpose.msra.mxu0 0.0
    %91 = vmatprep.subr.mxu0 0.0
    %92 = vmatpush1.xpose.msra.mxu0 %v66
    %93 = vmatprep.subr.mxu0 0.0
    %94 = vmatpush1.xpose.msra.mxu0 %v65
    %95 = vmatprep.subr.mxu0 0.0
    %96 = vmatpush1.xpose.msra.mxu0 %v64
    %97 = vmatprep.subr.mxu0 0.0
    %98 = vmatpush1.xpose.msra.mxu0 %v63
    %99 = vmatprep.subr.mxu0 0.0
    %100 = vmatpush2.xpose.msra.mxu0 0.0
    %101 = vmatprep.subr.mxu0 0.0
    %102 = vmatpush2.xpose.msra.mxu0 0.0
    %103 = vmatprep.subr.mxu0 0.0
    %104 = vmatpush2.xpose.msra.mxu0 0.0
    %105 = vmatprep.subr.mxu0 0.0
    %106 = vmatpush2.xpose.msra.mxu0 0.0
    %107 = vmatprep.subr.mxu0 0.0
    %108 = vmatpush2.xpose.msra.mxu0 0.0
    %109 = vmatprep.subr.mxu0 0.0
    %110 = vmatpush2.xpose.msra.mxu0 0.0
    %111 = vmatprep.subr.mxu0 0.0
    %112 = vmatpush2.xpose.msra.mxu0 0.0
    %113 = vmatprep.subr.mxu0 0.0
    %114 = vmatpush2.xpose.msra.mxu0 0.0
    %115 = vmatprep.subr.mxu0 0.0
    %116 = vmatpush2.xpose.msra.mxu0 0.0
    %117 = vmatprep.subr.mxu0 0.0
    %118 = vmatpush2.xpose.msra.mxu0 0.0
    %119 = vmatprep.subr.mxu0 0.0
    %120 = vmatpush2.xpose.msra.mxu0 0.0
    %121 = vmatprep.subr.mxu0 0.0
    %122 = vmatpush2.xpose.msra.mxu0 0.0
    %123 = vmatprep.subr.mxu0 0.0
    %124 = vmatpush2.xpose.msra.mxu0 0.0
    %125 = vmatprep.subr.mxu0 0.0
    %126 = vmatpush2.xpose.msra.mxu0 0.0
    %127 = vmatprep.subr.mxu0 0.0
    %128 = vmatpush2.xpose.msra.mxu0 0.0
    %129 = vmatprep.subr.mxu0 0.0
    %130 = vmatpush2.xpose.msra.mxu0 0.0
    %131 = vmatprep.mubr.f32.mxu0 0.0
    %132 = vmatmul.mubr.f32.gmra.mxu0 %v47
    %v133 = vpop.f32.mrf.mxu0
    %v134 = vadd.f32 0.0, %v133
    %v135 = vpop.f32.mrf.mxu0
    %136 = vmatprep.mubr.f32.mxu0 0.0
    %137 = vmatmul.mubr.f32.gmra.mxu0 %v48
    %v138 = vpop.f32.mrf.mxu0
    %v139 = vadd.f32 0.0, %v138
    %v140 = vpop.f32.mrf.mxu0
    %141 = vmatprep.mubr.f32.mxu0 0.0
    %142 = vmatmul.mubr.f32.gmra.mxu0 %v49
    %v143 = vpop.f32.mrf.mxu0
    %v144 = vadd.f32 0.0, %v143
    %v145 = vpop.f32.mrf.mxu0
    %146 = vmatprep.mubr.f32.mxu0 0.0
    %147 = vmatmul.mubr.f32.gmra.mxu0 %v50
    %v148 = vpop.f32.mrf.mxu0
    %v149 = vadd.f32 0.0, %v148
    %v150 = vpop.f32.mrf.mxu0
    %151 = vmatprep.mubr.f32.mxu0 0.0
    %152 = vmatmul.mubr.f32.gmra.mxu0 %v51
    %v153 = vpop.f32.mrf.mxu0
    %v154 = vadd.f32 0.0, %v153
    %v155 = vpop.f32.mrf.mxu0
    %156 = vmatprep.mubr.f32.mxu0 0.0
    %157 = vmatmul.mubr.f32.gmra.mxu0 %v52
    %v158 = vpop.f32.mrf.mxu0
    %v159 = vadd.f32 0.0, %v158
    %v160 = vpop.f32.mrf.mxu0
    %161 = vmatprep.mubr.f32.mxu0 0.0
    %162 = vmatmul.mubr.f32.gmra.mxu0 %v53
    %v163 = vpop.f32.mrf.mxu0
    %v164 = vadd.f32 0.0, %v163
    %v165 = vpop.f32.mrf.mxu0
    %166 = vmatprep.mubr.f32.mxu0 0.0
    %167 = vmatmul.mubr.f32.gmra.mxu0 %v54
    %v168 = vpop.f32.mrf.mxu0
    %v169 = vadd.f32 0.0, %v168
    %v170 = vpop.f32.mrf.mxu0
    %171 = vmatprep.mubr.f32.mxu0 0.0
    %172 = vmatmul.mubr.f32.gmra.mxu0 %v55
    %v173 = vpop.f32.mrf.mxu0
    %v174 = vadd.f32 0.0, %v173
    %v175 = vpop.f32.mrf.mxu0
    %176 = vmatprep.mubr.f32.mxu0 0.0
    %177 = vmatmul.mubr.f32.gmra.mxu0 %v56
    %v178 = vpop.f32.mrf.mxu0
    %v179 = vadd.f32 0.0, %v178
    %v180 = vpop.f32.mrf.mxu0
    %181 = vmatprep.mubr.f32.mxu0 0.0
    %182 = vmatmul.mubr.f32.gmra.mxu0 %v57
    %v183 = vpop.f32.mrf.mxu0
    %v184 = vadd.f32 0.0, %v183
    %v185 = vpop.f32.mrf.mxu0
    %186 = vmatprep.mubr.f32.mxu0 0.0
    %187 = vmatmul.mubr.f32.gmra.mxu0 %v58
    %v188 = vpop.f32.mrf.mxu0
    %v189 = vadd.f32 0.0, %v188
    %v190 = vpop.f32.mrf.mxu0
    %191 = vmatprep.mubr.f32.mxu0 0.0
    %192 = vmatmul.mubr.f32.gmra.mxu0 %v59
    %v193 = vpop.f32.mrf.mxu0
    %v194 = vadd.f32 0.0, %v193
    %v195 = vpop.f32.mrf.mxu0
    %196 = vmatprep.mubr.f32.mxu0 0.0
    %197 = vmatmul.mubr.f32.gmra.mxu0 %v60
    %v198 = vpop.f32.mrf.mxu0
    %v199 = vadd.f32 0.0, %v198
    %v200 = vpop.f32.mrf.mxu0
    %201 = vmatprep.mubr.f32.mxu0 0.0
    %202 = vmatmul.mubr.f32.gmra.mxu0 %v61
    %v203 = vpop.f32.mrf.mxu0
    %v204 = vadd.f32 0.0, %v203
    %v205 = vpop.f32.mrf.mxu0
    %206 = vmatprep.mubr.f32.mxu0 0.0
    %207 = vmatmul.mubr.f32.gmra.mxu0 %v62
    %v208 = vpop.f32.mrf.mxu0
    %v209 = vadd.f32 0.0, %v208
    %v210 = vpop.f32.mrf.mxu0
    %211 = vdwg.mxu0
    %v212 = vld [vmem:[%s2] sm:$0x1]
    %v213 = vmul.f32 %v134, 2.0
    %v214 = vmul.f32 %v139, 2.0
    %v215 = vmul.f32 %v144, 2.0
    %v216 = vmul.f32 %v149, 2.0
    %v217 = vmul.f32 %v154, 2.0
    %v218 = vmul.f32 %v159, 2.0
    %v219 = vmul.f32 %v164, 2.0
    %v220 = vmul.f32 %v169, 2.0
    %v221 = vmul.f32 %v174, 2.0
    %v222 = vmul.f32 %v179, 2.0
    %v223 = vmul.f32 %v184, 2.0
    %v224 = vmul.f32 %v189, 2.0
    %v225 = vmul.f32 %v194, 2.0
    %v226 = vmul.f32 %v199, 2.0
    %v227 = vmul.f32 %v204, 2.0
    %v228 = vmul.f32 %v209, 2.0
    %v230 = vlaneseq
    %v231 = vshrl.u32 %v230, 7
    %v232 = vsub.s32 0, %v231
    %v233 = vrot.slane %v212, %v232
    %v235 = vsub.f32 %v233, %v213
    %v236 = vsub.f32 %v233, %v214
    %v237 = vsub.f32 %v233, %v215
    %v238 = vsub.f32 %v233, %v216
    %v239 = vsub.f32 %v233, %v217
    %v240 = vsub.f32 %v233, %v218
    %v241 = vsub.f32 %v233, %v219
    %v242 = vsub.f32 %v233, %v220
    %v243 = vsub.f32 %v233, %v221
    %v244 = vsub.f32 %v233, %v222
    %v245 = vsub.f32 %v233, %v223
    %v246 = vsub.f32 %v233, %v224
    %v247 = vsub.f32 %v233, %v225
    %v248 = vsub.f32 %v233, %v226
    %v249 = vsub.f32 %v233, %v227
    %v250 = vsub.f32 %v233, %v228
    %vm251 = vcmask 261120
    %v252 = vsel %vm251, %v235, inf
    %253 = vmin.xlane.f32.xlu0 %v252
    %v254 = vpop.xlane.xlu0 %253
    %v255 = vsel %vm251, %v236, inf
    %256 = vmin.xlane.f32.xlu0 %v255
    %v257 = vpop.xlane.xlu0 %256
    %v258 = vsel %vm251, %v237, inf
    %259 = vmin.xlane.f32.xlu0 %v258
    %v260 = vpop.xlane.xlu0 %259
    %v261 = vsel %vm251, %v238, inf
    %262 = vmin.xlane.f32.xlu0 %v261
    %v263 = vpop.xlane.xlu0 %262
    %v264 = vsel %vm251, %v239, inf
    %265 = vmin.xlane.f32.xlu0 %v264
    %v266 = vpop.xlane.xlu0 %265
    %v267 = vsel %vm251, %v240, inf
    %268 = vmin.xlane.f32.xlu0 %v267
    %v269 = vpop.xlane.xlu0 %268
    %v270 = vsel %vm251, %v241, inf
    %271 = vmin.xlane.f32.xlu0 %v270
    %v272 = vpop.xlane.xlu0 %271
    %v273 = vsel %vm251, %v242, inf
    %274 = vmin.xlane.f32.xlu0 %v273
    %v275 = vpop.xlane.xlu0 %274
    %v276 = vsel %vm251, %v243, inf
    %277 = vmin.xlane.f32.xlu0 %v276
    %v278 = vpop.xlane.xlu0 %277
    %v279 = vsel %vm251, %v244, inf
    %280 = vmin.xlane.f32.xlu0 %v279
    %v281 = vpop.xlane.xlu0 %280
    %v282 = vsel %vm251, %v245, inf
    %283 = vmin.xlane.f32.xlu0 %v282
    %v284 = vpop.xlane.xlu0 %283
    %v285 = vsel %vm251, %v246, inf
    %286 = vmin.xlane.f32.xlu0 %v285
    %v287 = vpop.xlane.xlu0 %286
    %v288 = vsel %vm251, %v247, inf
    %289 = vmin.xlane.f32.xlu0 %v288
    %v290 = vpop.xlane.xlu0 %289
    %v291 = vsel %vm251, %v248, inf
    %292 = vmin.xlane.f32.xlu0 %v291
    %v293 = vpop.xlane.xlu0 %292
    %v294 = vsel %vm251, %v249, inf
    %295 = vmin.xlane.f32.xlu0 %v294
    %v296 = vpop.xlane.xlu0 %295
    %v297 = vsel %vm251, %v250, inf
    %298 = vmin.xlane.f32.xlu0 %v297
    %v299 = vpop.xlane.xlu0 %298
    %v300 = vlaneseq
    %v301 = vand.u32 %v300, 127
    %vm302 = vcmp.eq.f32.partialorder %v235, %v254
    %vm303 = vcmp.eq.f32.partialorder %v236, %v257
    %vm304 = vcmp.eq.f32.partialorder %v237, %v260
    %vm305 = vcmp.eq.f32.partialorder %v238, %v263
    %vm306 = vcmp.eq.f32.partialorder %v239, %v266
    %vm307 = vcmp.eq.f32.partialorder %v240, %v269
    %vm308 = vcmp.eq.f32.partialorder %v241, %v272
    %vm309 = vcmp.eq.f32.partialorder %v242, %v275
    %vm310 = vcmp.eq.f32.partialorder %v243, %v278
    %vm311 = vcmp.eq.f32.partialorder %v244, %v281
    %vm312 = vcmp.eq.f32.partialorder %v245, %v284
    %vm313 = vcmp.eq.f32.partialorder %v246, %v287
    %vm314 = vcmp.eq.f32.partialorder %v247, %v290
    %vm315 = vcmp.eq.f32.partialorder %v248, %v293
    %vm316 = vcmp.eq.f32.partialorder %v249, %v296
    %vm317 = vcmp.eq.f32.partialorder %v250, %v299
    %v318 = vsel %vm302, %v301, 32
    %v319 = vsel %vm303, %v301, 32
    %v320 = vsel %vm304, %v301, 32
    %v321 = vsel %vm305, %v301, 32
    %v322 = vsel %vm306, %v301, 32
    %v323 = vsel %vm307, %v301, 32
    %v324 = vsel %vm308, %v301, 32
    %v325 = vsel %vm309, %v301, 32
    %v326 = vsel %vm310, %v301, 32
    %v327 = vsel %vm311, %v301, 32
    %v328 = vsel %vm312, %v301, 32
    %v329 = vsel %vm313, %v301, 32
    %v330 = vsel %vm314, %v301, 32
    %v331 = vsel %vm315, %v301, 32
    %v332 = vsel %vm316, %v301, 32
    %v333 = vsel %vm317, %v301, 32
    %v334 = vsel %vm251, %v318, 2147483647
    %v335 = vand.u32 %v334, 65535
    %v336 = vshra.s32 %v334, 16
    %v337 = vcvt.s32.f32 %v335
    %v338 = vcvt.s32.f32 %v336
    %339 = vmin.xlane.f32.xlu0 %v338
    %v340 = vpop.xlane.xlu0 %339
    %vm341 = vcmp.eq.f32.partialorder %v338, %v340
    %v342 = vsel %vm341, %v337, inf
    %343 = vmin.xlane.f32.xlu0 %v342
    %v344 = vpop.xlane.xlu0 %343
    %v345 = vcvt.f32.s32 %v344
    %v346 = vcvt.f32.s32 %v340
    %v347 = vshll.u32 %v346, 16
    %v348 = vadd.s32 %v347, %v345
    %v349 = vsel %vm251, %v319, 2147483647
    %v350 = vand.u32 %v349, 65535
    %v351 = vshra.s32 %v349, 16
    %v352 = vcvt.s32.f32 %v350
    %v353 = vcvt.s32.f32 %v351
    %354 = vmin.xlane.f32.xlu0 %v353
    %v355 = vpop.xlane.xlu0 %354
    %vm356 = vcmp.eq.f32.partialorder %v353, %v355
    %v357 = vsel %vm356, %v352, inf
    %358 = vmin.xlane.f32.xlu0 %v357
    %v359 = vpop.xlane.xlu0 %358
    %v360 = vcvt.f32.s32 %v359
    %v361 = vcvt.f32.s32 %v355
    %v362 = vshll.u32 %v361, 16
    %v363 = vadd.s32 %v362, %v360
    %v364 = vsel %vm251, %v320, 2147483647
    %v365 = vand.u32 %v364, 65535
    %v366 = vshra.s32 %v364, 16
    %v367 = vcvt.s32.f32 %v365
    %v368 = vcvt.s32.f32 %v366
    %369 = vmin.xlane.f32.xlu0 %v368
    %v370 = vpop.xlane.xlu0 %369
    %vm371 = vcmp.eq.f32.partialorder %v368, %v370
    %v372 = vsel %vm371, %v367, inf
    %373 = vmin.xlane.f32.xlu0 %v372
    %v374 = vpop.xlane.xlu0 %373
    %v375 = vcvt.f32.s32 %v374
    %v376 = vcvt.f32.s32 %v370
    %v377 = vshll.u32 %v376, 16
    %v378 = vadd.s32 %v377, %v375
    %v379 = vsel %vm251, %v321, 2147483647
    %v380 = vand.u32 %v379, 65535
    %v381 = vshra.s32 %v379, 16
    %v382 = vcvt.s32.f32 %v380
    %v383 = vcvt.s32.f32 %v381
    %384 = vmin.xlane.f32.xlu0 %v383
    %v385 = vpop.xlane.xlu0 %384
    %vm386 = vcmp.eq.f32.partialorder %v383, %v385
    %v387 = vsel %vm386, %v382, inf
    %388 = vmin.xlane.f32.xlu0 %v387
    %v389 = vpop.xlane.xlu0 %388
    %v390 = vcvt.f32.s32 %v389
    %v391 = vcvt.f32.s32 %v385
    %v392 = vshll.u32 %v391, 16
    %v393 = vadd.s32 %v392, %v390
    %v394 = vsel %vm251, %v322, 2147483647
    %v395 = vand.u32 %v394, 65535
    %v396 = vshra.s32 %v394, 16
    %v397 = vcvt.s32.f32 %v395
    %v398 = vcvt.s32.f32 %v396
    %399 = vmin.xlane.f32.xlu0 %v398
    %v400 = vpop.xlane.xlu0 %399
    %vm401 = vcmp.eq.f32.partialorder %v398, %v400
    %v402 = vsel %vm401, %v397, inf
    %403 = vmin.xlane.f32.xlu0 %v402
    %v404 = vpop.xlane.xlu0 %403
    %v405 = vcvt.f32.s32 %v404
    %v406 = vcvt.f32.s32 %v400
    %v407 = vshll.u32 %v406, 16
    %v408 = vadd.s32 %v407, %v405
    %v409 = vsel %vm251, %v323, 2147483647
    %v410 = vand.u32 %v409, 65535
    %v411 = vshra.s32 %v409, 16
    %v412 = vcvt.s32.f32 %v410
    %v413 = vcvt.s32.f32 %v411
    %414 = vmin.xlane.f32.xlu0 %v413
    %v415 = vpop.xlane.xlu0 %414
    %vm416 = vcmp.eq.f32.partialorder %v413, %v415
    %v417 = vsel %vm416, %v412, inf
    %418 = vmin.xlane.f32.xlu0 %v417
    %v419 = vpop.xlane.xlu0 %418
    %v420 = vcvt.f32.s32 %v419
    %v421 = vcvt.f32.s32 %v415
    %v422 = vshll.u32 %v421, 16
    %v423 = vadd.s32 %v422, %v420
    %v424 = vsel %vm251, %v324, 2147483647
    %v425 = vand.u32 %v424, 65535
    %v426 = vshra.s32 %v424, 16
    %v427 = vcvt.s32.f32 %v425
    %v428 = vcvt.s32.f32 %v426
    %429 = vmin.xlane.f32.xlu0 %v428
    %v430 = vpop.xlane.xlu0 %429
    %vm431 = vcmp.eq.f32.partialorder %v428, %v430
    %v432 = vsel %vm431, %v427, inf
    %433 = vmin.xlane.f32.xlu0 %v432
    %v434 = vpop.xlane.xlu0 %433
    %v435 = vcvt.f32.s32 %v434
    %v436 = vcvt.f32.s32 %v430
    %v437 = vshll.u32 %v436, 16
    %v438 = vadd.s32 %v437, %v435
    %v439 = vsel %vm251, %v325, 2147483647
    %v440 = vand.u32 %v439, 65535
    %v441 = vshra.s32 %v439, 16
    %v442 = vcvt.s32.f32 %v440
    %v443 = vcvt.s32.f32 %v441
    %444 = vmin.xlane.f32.xlu0 %v443
    %v445 = vpop.xlane.xlu0 %444
    %vm446 = vcmp.eq.f32.partialorder %v443, %v445
    %v447 = vsel %vm446, %v442, inf
    %448 = vmin.xlane.f32.xlu0 %v447
    %v449 = vpop.xlane.xlu0 %448
    %v450 = vcvt.f32.s32 %v449
    %v451 = vcvt.f32.s32 %v445
    %v452 = vshll.u32 %v451, 16
    %v453 = vadd.s32 %v452, %v450
    %v454 = vsel %vm251, %v326, 2147483647
    %v455 = vand.u32 %v454, 65535
    %v456 = vshra.s32 %v454, 16
    %v457 = vcvt.s32.f32 %v455
    %v458 = vcvt.s32.f32 %v456
    %459 = vmin.xlane.f32.xlu0 %v458
    %v460 = vpop.xlane.xlu0 %459
    %vm461 = vcmp.eq.f32.partialorder %v458, %v460
    %v462 = vsel %vm461, %v457, inf
    %463 = vmin.xlane.f32.xlu0 %v462
    %v464 = vpop.xlane.xlu0 %463
    %v465 = vcvt.f32.s32 %v464
    %v466 = vcvt.f32.s32 %v460
    %v467 = vshll.u32 %v466, 16
    %v468 = vadd.s32 %v467, %v465
    %v469 = vsel %vm251, %v327, 2147483647
    %v470 = vand.u32 %v469, 65535
    %v471 = vshra.s32 %v469, 16
    %v472 = vcvt.s32.f32 %v470
    %v473 = vcvt.s32.f32 %v471
    %474 = vmin.xlane.f32.xlu0 %v473
    %v475 = vpop.xlane.xlu0 %474
    %vm476 = vcmp.eq.f32.partialorder %v473, %v475
    %v477 = vsel %vm476, %v472, inf
    %478 = vmin.xlane.f32.xlu0 %v477
    %v479 = vpop.xlane.xlu0 %478
    %v480 = vcvt.f32.s32 %v479
    %v481 = vcvt.f32.s32 %v475
    %v482 = vshll.u32 %v481, 16
    %v483 = vadd.s32 %v482, %v480
    %v484 = vsel %vm251, %v328, 2147483647
    %v485 = vand.u32 %v484, 65535
    %v486 = vshra.s32 %v484, 16
    %v487 = vcvt.s32.f32 %v485
    %v488 = vcvt.s32.f32 %v486
    %489 = vmin.xlane.f32.xlu0 %v488
    %v490 = vpop.xlane.xlu0 %489
    %vm491 = vcmp.eq.f32.partialorder %v488, %v490
    %v492 = vsel %vm491, %v487, inf
    %493 = vmin.xlane.f32.xlu0 %v492
    %v494 = vpop.xlane.xlu0 %493
    %v495 = vcvt.f32.s32 %v494
    %v496 = vcvt.f32.s32 %v490
    %v497 = vshll.u32 %v496, 16
    %v498 = vadd.s32 %v497, %v495
    %v499 = vsel %vm251, %v329, 2147483647
    %v500 = vand.u32 %v499, 65535
    %v501 = vshra.s32 %v499, 16
    %v502 = vcvt.s32.f32 %v500
    %v503 = vcvt.s32.f32 %v501
    %504 = vmin.xlane.f32.xlu0 %v503
    %v505 = vpop.xlane.xlu0 %504
    %vm506 = vcmp.eq.f32.partialorder %v503, %v505
    %v507 = vsel %vm506, %v502, inf
    %508 = vmin.xlane.f32.xlu0 %v507
    %v509 = vpop.xlane.xlu0 %508
    %v510 = vcvt.f32.s32 %v509
    %v511 = vcvt.f32.s32 %v505
    %v512 = vshll.u32 %v511, 16
    %v513 = vadd.s32 %v512, %v510
    %v514 = vsel %vm251, %v330, 2147483647
    %v515 = vand.u32 %v514, 65535
    %v516 = vshra.s32 %v514, 16
    %v517 = vcvt.s32.f32 %v515
    %v518 = vcvt.s32.f32 %v516
    %519 = vmin.xlane.f32.xlu0 %v518
    %v520 = vpop.xlane.xlu0 %519
    %vm521 = vcmp.eq.f32.partialorder %v518, %v520
    %v522 = vsel %vm521, %v517, inf
    %523 = vmin.xlane.f32.xlu0 %v522
    %v524 = vpop.xlane.xlu0 %523
    %v525 = vcvt.f32.s32 %v524
    %v526 = vcvt.f32.s32 %v520
    %v527 = vshll.u32 %v526, 16
    %v528 = vadd.s32 %v527, %v525
    %v529 = vsel %vm251, %v331, 2147483647
    %v530 = vand.u32 %v529, 65535
    %v531 = vshra.s32 %v529, 16
    %v532 = vcvt.s32.f32 %v530
    %v533 = vcvt.s32.f32 %v531
    %534 = vmin.xlane.f32.xlu0 %v533
    %v535 = vpop.xlane.xlu0 %534
    %vm536 = vcmp.eq.f32.partialorder %v533, %v535
    %v537 = vsel %vm536, %v532, inf
    %538 = vmin.xlane.f32.xlu0 %v537
    %v539 = vpop.xlane.xlu0 %538
    %v540 = vcvt.f32.s32 %v539
    %v541 = vcvt.f32.s32 %v535
    %v542 = vshll.u32 %v541, 16
    %v543 = vadd.s32 %v542, %v540
    %v544 = vsel %vm251, %v332, 2147483647
    %v545 = vand.u32 %v544, 65535
    %v546 = vshra.s32 %v544, 16
    %v547 = vcvt.s32.f32 %v545
    %v548 = vcvt.s32.f32 %v546
    %549 = vmin.xlane.f32.xlu0 %v548
    %v550 = vpop.xlane.xlu0 %549
    %vm551 = vcmp.eq.f32.partialorder %v548, %v550
    %v552 = vsel %vm551, %v547, inf
    %553 = vmin.xlane.f32.xlu0 %v552
    %v554 = vpop.xlane.xlu0 %553
    %v555 = vcvt.f32.s32 %v554
    %v556 = vcvt.f32.s32 %v550
    %v557 = vshll.u32 %v556, 16
    %v558 = vadd.s32 %v557, %v555
    %v559 = vsel %vm251, %v333, 2147483647
    %v560 = vand.u32 %v559, 65535
    %v561 = vshra.s32 %v559, 16
    %v562 = vcvt.s32.f32 %v560
    %v563 = vcvt.s32.f32 %v561
    %564 = vmin.xlane.f32.xlu0 %v563
    %v565 = vpop.xlane.xlu0 %564
    %vm566 = vcmp.eq.f32.partialorder %v563, %v565
    %v567 = vsel %vm566, %v562, inf
    %568 = vmin.xlane.f32.xlu0 %v567
    %v569 = vpop.xlane.xlu0 %568
    %v570 = vcvt.f32.s32 %v569
    %v571 = vcvt.f32.s32 %v565
    %v572 = vshll.u32 %v571, 16
    %v573 = vadd.s32 %v572, %v570
    %vm574 = vcmp.eq.s32.totalorder %v301, %v348
    %vm575 = vcmp.eq.s32.totalorder %v301, %v363
    %vm576 = vcmp.eq.s32.totalorder %v301, %v378
    %vm577 = vcmp.eq.s32.totalorder %v301, %v393
    %vm578 = vcmp.eq.s32.totalorder %v301, %v408
    %vm579 = vcmp.eq.s32.totalorder %v301, %v423
    %vm580 = vcmp.eq.s32.totalorder %v301, %v438
    %vm581 = vcmp.eq.s32.totalorder %v301, %v453
    %vm582 = vcmp.eq.s32.totalorder %v301, %v468
    %vm583 = vcmp.eq.s32.totalorder %v301, %v483
    %vm584 = vcmp.eq.s32.totalorder %v301, %v498
    %vm585 = vcmp.eq.s32.totalorder %v301, %v513
    %vm586 = vcmp.eq.s32.totalorder %v301, %v528
    %vm587 = vcmp.eq.s32.totalorder %v301, %v543
    %vm588 = vcmp.eq.s32.totalorder %v301, %v558
    %vm589 = vcmp.eq.s32.totalorder %v301, %v573
    %v590 = vsel %vm574, 1, 0
    %v591 = vsel %vm575, 1, 0
    %v592 = vsel %vm576, 1, 0
    %v593 = vsel %vm577, 1, 0
    %v594 = vsel %vm578, 1, 0
    %v595 = vsel %vm579, 1, 0
    %v596 = vsel %vm580, 1, 0
    %v597 = vsel %vm581, 1, 0
    %v598 = vsel %vm582, 1, 0
    %v599 = vsel %vm583, 1, 0
    %v600 = vsel %vm584, 1, 0
    %v601 = vsel %vm585, 1, 0
    %v602 = vsel %vm586, 1, 0
    %v603 = vsel %vm587, 1, 0
    %v604 = vsel %vm588, 1, 0
    %v605 = vsel %vm589, 1, 0
    %v606 = vcvt.s32.f32 %v590
    %v607 = vcvt.s32.f32 %v591
    %v608 = vcvt.s32.f32 %v592
    %v609 = vcvt.s32.f32 %v593
    %v610 = vcvt.s32.f32 %v594
    %v611 = vcvt.s32.f32 %v595
    %v612 = vcvt.s32.f32 %v596
    %v613 = vcvt.s32.f32 %v597
    %v614 = vcvt.s32.f32 %v598
    %v615 = vcvt.s32.f32 %v599
    %v616 = vcvt.s32.f32 %v600
    %v617 = vcvt.s32.f32 %v601
    %v618 = vcvt.s32.f32 %v602
    %v619 = vcvt.s32.f32 %v603
    %v620 = vcvt.s32.f32 %v604
    %v621 = vcvt.s32.f32 %v605
    %v623 = vsel %vm251, %v606, 0
    %v626 = vsel %vm251, %v607, 0
    %v629 = vsel %vm251, %v608, 0
    %v632 = vsel %vm251, %v609, 0
    %v635 = vsel %vm251, %v610, 0
    %v638 = vsel %vm251, %v611, 0
    %v641 = vsel %vm251, %v612, 0
    %v644 = vsel %vm251, %v613, 0
    %v647 = vsel %vm251, %v614, 0
    %v650 = vsel %vm251, %v615, 0
    %v653 = vsel %vm251, %v616, 0
    %v656 = vsel %vm251, %v617, 0
    %v659 = vsel %vm251, %v618, 0
    %v662 = vsel %vm251, %v619, 0
    %v665 = vsel %vm251, %v620, 0
    %v668 = vsel %vm251, %v621, 0
    %670 = vmatprep.subr.mxu0 0.0
    %671 = vmatpush1.msra.mxu0 0.0
    %672 = vmatprep.subr.mxu0 0.0
    %673 = vmatpush1.msra.mxu0 0.0
    %674 = vmatprep.subr.mxu0 0.0
    %675 = vmatpush1.msra.mxu0 0.0
    %676 = vmatprep.subr.mxu0 0.0
    %677 = vmatpush1.msra.mxu0 0.0
    %678 = vmatprep.subr.mxu0 0.0
    %679 = vmatpush1.msra.mxu0 0.0
    %680 = vmatprep.subr.mxu0 0.0
    %681 = vmatpush1.msra.mxu0 0.0
    %682 = vmatprep.subr.mxu0 0.0
    %683 = vmatpush1.msra.mxu0 0.0
    %684 = vmatprep.subr.mxu0 0.0
    %685 = vmatpush1.msra.mxu0 0.0
    %686 = vmatprep.subr.mxu0 0.0
    %687 = vmatpush1.msra.mxu0 0.0
    %688 = vmatprep.subr.mxu0 0.0
    %689 = vmatpush1.msra.mxu0 0.0
    %690 = vmatprep.subr.mxu0 0.0
    %691 = vmatpush1.msra.mxu0 0.0
    %692 = vmatprep.subr.mxu0 0.0
    %693 = vmatpush1.msra.mxu0 0.0
    %694 = vmatprep.subr.mxu0 0.0
    %695 = vmatpush1.msra.mxu0 %v66
    %696 = vmatprep.subr.mxu0 0.0
    %697 = vmatpush1.msra.mxu0 %v65
    %698 = vmatprep.subr.mxu0 0.0
    %699 = vmatpush1.msra.mxu0 %v64
    %700 = vmatprep.subr.mxu0 0.0
    %701 = vmatpush1.msra.mxu0 %v63
    %702 = vmatprep.subr.mxu0 0.0
    %703 = vmatpush2.msra.mxu0 0.0
    %704 = vmatprep.subr.mxu0 0.0
    %705 = vmatpush2.msra.mxu0 0.0
    %706 = vmatprep.subr.mxu0 0.0
    %707 = vmatpush2.msra.mxu0 0.0
    %708 = vmatprep.subr.mxu0 0.0
    %709 = vmatpush2.msra.mxu0 0.0
    %710 = vmatprep.subr.mxu0 0.0
    %711 = vmatpush2.msra.mxu0 0.0
    %712 = vmatprep.subr.mxu0 0.0
    %713 = vmatpush2.msra.mxu0 0.0
    %714 = vmatprep.subr.mxu0 0.0
    %715 = vmatpush2.msra.mxu0 0.0
    %716 = vmatprep.subr.mxu0 0.0
    %717 = vmatpush2.msra.mxu0 0.0
    %718 = vmatprep.subr.mxu0 0.0
    %719 = vmatpush2.msra.mxu0 0.0
    %720 = vmatprep.subr.mxu0 0.0
    %721 = vmatpush2.msra.mxu0 0.0
    %722 = vmatprep.subr.mxu0 0.0
    %723 = vmatpush2.msra.mxu0 0.0
    %724 = vmatprep.subr.mxu0 0.0
    %725 = vmatpush2.msra.mxu0 0.0
    %726 = vmatprep.subr.mxu0 0.0
    %727 = vmatpush2.msra.mxu0 0.0
    %728 = vmatprep.subr.mxu0 0.0
    %729 = vmatpush2.msra.mxu0 0.0
    %730 = vmatprep.subr.mxu0 0.0
    %731 = vmatpush2.msra.mxu0 0.0
    %732 = vmatprep.subr.mxu0 0.0
    %733 = vmatpush2.msra.mxu0 0.0
    %734 = vmatprep.mubr.f32.mxu0 0.0
    %735 = vmatmul.mubr.f32.gmra.mxu0 %v623
    %v736 = vpop.f32.mrf.mxu0
    %v737 = vadd.f32 0.0, %v736
    %v738 = vpop.f32.mrf.mxu0
    %739 = vmatprep.mubr.f32.mxu0 0.0
    %740 = vmatmul.mubr.f32.gmra.mxu0 %v626
    %v741 = vpop.f32.mrf.mxu0
    %v742 = vadd.f32 0.0, %v741
    %v743 = vpop.f32.mrf.mxu0
    %744 = vmatprep.mubr.f32.mxu0 0.0
    %745 = vmatmul.mubr.f32.gmra.mxu0 %v629
    %v746 = vpop.f32.mrf.mxu0
    %v747 = vadd.f32 0.0, %v746
    %v748 = vpop.f32.mrf.mxu0
    %749 = vmatprep.mubr.f32.mxu0 0.0
    %750 = vmatmul.mubr.f32.gmra.mxu0 %v632
    %v751 = vpop.f32.mrf.mxu0
    %v752 = vadd.f32 0.0, %v751
    %v753 = vpop.f32.mrf.mxu0
    %754 = vmatprep.mubr.f32.mxu0 0.0
    %755 = vmatmul.mubr.f32.gmra.mxu0 %v635
    %v756 = vpop.f32.mrf.mxu0
    %v757 = vadd.f32 0.0, %v756
    %v758 = vpop.f32.mrf.mxu0
    %759 = vmatprep.mubr.f32.mxu0 0.0
    %760 = vmatmul.mubr.f32.gmra.mxu0 %v638
    %v761 = vpop.f32.mrf.mxu0
    %v762 = vadd.f32 0.0, %v761
    %v763 = vpop.f32.mrf.mxu0
    %764 = vmatprep.mubr.f32.mxu0 0.0
    %765 = vmatmul.mubr.f32.gmra.mxu0 %v641
    %v766 = vpop.f32.mrf.mxu0
    %v767 = vadd.f32 0.0, %v766
    %v768 = vpop.f32.mrf.mxu0
    %769 = vmatprep.mubr.f32.mxu0 0.0
    %770 = vmatmul.mubr.f32.gmra.mxu0 %v644
    %v771 = vpop.f32.mrf.mxu0
    %v772 = vadd.f32 0.0, %v771
    %v773 = vpop.f32.mrf.mxu0
    %774 = vmatprep.mubr.f32.mxu0 0.0
    %775 = vmatmul.mubr.f32.gmra.mxu0 %v647
    %v776 = vpop.f32.mrf.mxu0
    %v777 = vadd.f32 0.0, %v776
    %v778 = vpop.f32.mrf.mxu0
    %779 = vmatprep.mubr.f32.mxu0 0.0
    %780 = vmatmul.mubr.f32.gmra.mxu0 %v650
    %v781 = vpop.f32.mrf.mxu0
    %v782 = vadd.f32 0.0, %v781
    %v783 = vpop.f32.mrf.mxu0
    %784 = vmatprep.mubr.f32.mxu0 0.0
    %785 = vmatmul.mubr.f32.gmra.mxu0 %v653
    %v786 = vpop.f32.mrf.mxu0
    %v787 = vadd.f32 0.0, %v786
    %v788 = vpop.f32.mrf.mxu0
    %789 = vmatprep.mubr.f32.mxu0 0.0
    %790 = vmatmul.mubr.f32.gmra.mxu0 %v656
    %v791 = vpop.f32.mrf.mxu0
    %v792 = vadd.f32 0.0, %v791
    %v793 = vpop.f32.mrf.mxu0
    %794 = vmatprep.mubr.f32.mxu0 0.0
    %795 = vmatmul.mubr.f32.gmra.mxu0 %v659
    %v796 = vpop.f32.mrf.mxu0
    %v797 = vadd.f32 0.0, %v796
    %v798 = vpop.f32.mrf.mxu0
    %799 = vmatprep.mubr.f32.mxu0 0.0
    %800 = vmatmul.mubr.f32.gmra.mxu0 %v662
    %v801 = vpop.f32.mrf.mxu0
    %v802 = vadd.f32 0.0, %v801
    %v803 = vpop.f32.mrf.mxu0
    %804 = vmatprep.mubr.f32.mxu0 0.0
    %805 = vmatmul.mubr.f32.gmra.mxu0 %v665
    %v806 = vpop.f32.mrf.mxu0
    %v807 = vadd.f32 0.0, %v806
    %v808 = vpop.f32.mrf.mxu0
    %809 = vmatprep.mubr.f32.mxu0 0.0
    %810 = vmatmul.mubr.f32.gmra.mxu0 %v668
    %v811 = vpop.f32.mrf.mxu0
    %v812 = vadd.f32 0.0, %v811
    %v813 = vpop.f32.mrf.mxu0
    %814 = vdwg.mxu0
    %815 = vst [vmem:[#allocation7] sm:$0xff] %v737
    %816 = vst [vmem:[#allocation7 + $0x8] sm:$0xff] %v742
    %817 = vst [vmem:[#allocation7 + $0x10] sm:$0xff] %v747
    %818 = vst [vmem:[#allocation7 + $0x18] sm:$0xff] %v752
    %819 = vst [vmem:[#allocation7 + $0x20] sm:$0xff] %v757
    %820 = vst [vmem:[#allocation7 + $0x28] sm:$0xff] %v762
    %821 = vst [vmem:[#allocation7 + $0x30] sm:$0xff] %v767
    %822 = vst [vmem:[#allocation7 + $0x38] sm:$0xff] %v772
    %823 = vst [vmem:[#allocation7 + $0x40] sm:$0xff] %v777
    %824 = vst [vmem:[#allocation7 + $0x48] sm:$0xff] %v782
    %825 = vst [vmem:[#allocation7 + $0x50] sm:$0xff] %v787
    %826 = vst [vmem:[#allocation7 + $0x58] sm:$0xff] %v792
    %827 = vst [vmem:[#allocation7 + $0x60] sm:$0xff] %v797
    %828 = vst [vmem:[#allocation7 + $0x68] sm:$0xff] %v802
    %829 = vst [vmem:[#allocation7 + $0x70] sm:$0xff] %v807
    %830 = vst [vmem:[#allocation7 + $0x78] sm:$0xff] %v812
    %v831 = vcvt.s32.f32 %v301
    %v833 = vsel %vm251, %v831, 0
    %835 = vmatprep.subr.mxu0 0.0
    %836 = vmatpush1.xpose.msra.mxu0 %v668
    %837 = vmatprep.subr.mxu0 0.0
    %838 = vmatpush1.xpose.msra.mxu0 %v665
    %839 = vmatprep.subr.mxu0 0.0
    %840 = vmatpush1.xpose.msra.mxu0 %v662
    %841 = vmatprep.subr.mxu0 0.0
    %842 = vmatpush1.xpose.msra.mxu0 %v659
    %843 = vmatprep.subr.mxu0 0.0
    %844 = vmatpush1.xpose.msra.mxu0 %v656
    %845 = vmatprep.subr.mxu0 0.0
    %846 = vmatpush1.xpose.msra.mxu0 %v653
    %847 = vmatprep.subr.mxu0 0.0
    %848 = vmatpush1.xpose.msra.mxu0 %v650
    %849 = vmatprep.subr.mxu0 0.0
    %850 = vmatpush1.xpose.msra.mxu0 %v647
    %851 = vmatprep.subr.mxu0 0.0
    %852 = vmatpush1.xpose.msra.mxu0 %v644
    %853 = vmatprep.subr.mxu0 0.0
    %854 = vmatpush1.xpose.msra.mxu0 %v641
    %855 = vmatprep.subr.mxu0 0.0
    %856 = vmatpush1.xpose.msra.mxu0 %v638
    %857 = vmatprep.subr.mxu0 0.0
    %858 = vmatpush1.xpose.msra.mxu0 %v635
    %859 = vmatprep.subr.mxu0 0.0
    %860 = vmatpush1.xpose.msra.mxu0 %v632
    %861 = vmatprep.subr.mxu0 0.0
    %862 = vmatpush1.xpose.msra.mxu0 %v629
    %863 = vmatprep.subr.mxu0 0.0
    %864 = vmatpush1.xpose.msra.mxu0 %v626
    %865 = vmatprep.subr.mxu0 0.0
    %866 = vmatpush1.xpose.msra.mxu0 %v623
    %867 = vmatprep.subr.mxu0 0.0
    %868 = vmatpush2.xpose.msra.mxu0 0.0
    %869 = vmatprep.subr.mxu0 0.0
    %870 = vmatpush2.xpose.msra.mxu0 0.0
    %871 = vmatprep.subr.mxu0 0.0
    %872 = vmatpush2.xpose.msra.mxu0 0.0
    %873 = vmatprep.subr.mxu0 0.0
    %874 = vmatpush2.xpose.msra.mxu0 0.0
    %875 = vmatprep.subr.mxu0 0.0
    %876 = vmatpush2.xpose.msra.mxu0 0.0
    %877 = vmatprep.subr.mxu0 0.0
    %878 = vmatpush2.xpose.msra.mxu0 0.0
    %879 = vmatprep.subr.mxu0 0.0
    %880 = vmatpush2.xpose.msra.mxu0 0.0
    %881 = vmatprep.subr.mxu0 0.0
    %882 = vmatpush2.xpose.msra.mxu0 0.0
    %883 = vmatprep.subr.mxu0 0.0
    %884 = vmatpush2.xpose.msra.mxu0 0.0
    %885 = vmatprep.subr.mxu0 0.0
    %886 = vmatpush2.xpose.msra.mxu0 0.0
    %887 = vmatprep.subr.mxu0 0.0
    %888 = vmatpush2.xpose.msra.mxu0 0.0
    %889 = vmatprep.subr.mxu0 0.0
    %890 = vmatpush2.xpose.msra.mxu0 0.0
    %891 = vmatprep.subr.mxu0 0.0
    %892 = vmatpush2.xpose.msra.mxu0 0.0
    %893 = vmatprep.subr.mxu0 0.0
    %894 = vmatpush2.xpose.msra.mxu0 0.0
    %895 = vmatprep.subr.mxu0 0.0
    %896 = vmatpush2.xpose.msra.mxu0 0.0
    %897 = vmatprep.subr.mxu0 0.0
    %898 = vmatpush2.xpose.msra.mxu0 0.0
    %899 = vmatprep.mubr.f32.mxu0 0.0
    %900 = vmatmul.mubr.f32.gmra.mxu0 %v833
    %v901 = vpop.f32.mrf.mxu0
    %v902 = vadd.f32 0.0, %v901
    %v903 = vpop.f32.mrf.mxu0
    %904 = vdwg.mxu0
    %v905 = vcvt.f32.s32.to.zero.pseudo %v902
    %906 = vst [vmem:[#allocation8] sm:$0x1] %v905
    %v907 = vsub.f32 %v737, %v47
    %v908 = vsub.f32 %v742, %v48
    %v909 = vsub.f32 %v747, %v49
    %v910 = vsub.f32 %v752, %v50
    %v911 = vsub.f32 %v757, %v51
    %v912 = vsub.f32 %v762, %v52
    %v913 = vsub.f32 %v767, %v53
    %v914 = vsub.f32 %v772, %v54
    %v915 = vsub.f32 %v777, %v55
    %v916 = vsub.f32 %v782, %v56
    %v917 = vsub.f32 %v787, %v57
    %v918 = vsub.f32 %v792, %v58
    %v919 = vsub.f32 %v797, %v59
    %v920 = vsub.f32 %v802, %v60
    %v921 = vsub.f32 %v807, %v61
    %v922 = vsub.f32 %v812, %v62
    %v923 = vmul.f32 %v907, %v907
    %v924 = vmul.f32 %v908, %v908
    %v925 = vmul.f32 %v909, %v909
    %v926 = vmul.f32 %v910, %v910
    %v927 = vmul.f32 %v911, %v911
    %v928 = vmul.f32 %v912, %v912
    %v929 = vmul.f32 %v913, %v913
    %v930 = vmul.f32 %v914, %v914
    %v931 = vmul.f32 %v915, %v915
    %v932 = vmul.f32 %v916, %v916
    %v933 = vmul.f32 %v917, %v917
    %v934 = vmul.f32 %v918, %v918
    %v935 = vmul.f32 %v919, %v919
    %v936 = vmul.f32 %v920, %v920
    %v937 = vmul.f32 %v921, %v921
    %v938 = vmul.f32 %v922, %v922
    %v939 = vadd.f32 %v923, %v924
    %v940 = vadd.f32 %v939, %v925
    %v941 = vadd.f32 %v940, %v926
    %v942 = vadd.f32 %v941, %v927
    %v943 = vadd.f32 %v942, %v928
    %v944 = vadd.f32 %v943, %v929
    %v945 = vadd.f32 %v944, %v930
    %v946 = vadd.f32 %v945, %v931
    %v947 = vadd.f32 %v946, %v932
    %v948 = vadd.f32 %v947, %v933
    %v949 = vadd.f32 %v948, %v934
    %v950 = vadd.f32 %v949, %v935
    %v951 = vadd.f32 %v950, %v936
    %v952 = vadd.f32 %v951, %v937
    %v953 = vadd.f32 %v952, %v938
    %v954 = vrot.slane %v953, 4
    %v955 = vadd.f32 %v953, %v954
    %v956 = vrot.slane %v955, 2
    %v957 = vadd.f32 %v955, %v956
    %v958 = vrot.slane %v957, 1
    %v959 = vadd.f32 %v957, %v958
    %960 = vst [vmem:[#allocation10] sm:$0x1] %v959
    // Predicated region
    $region22: #{tpu_custom_call.1} parent=1 // pred_check
      _
    $region23: #{tpu_custom_call.1} parent=1 // pred_check_branch
      %962 = sbr.rel (0) target = $region25
    $region24: #{tpu_custom_call.1} parent=1 // pred_region
      %s964 = ssub.s32 2048, 2048
      %965 = vsyncadd [#allocation4], %s964
      %s966 = sshll.u32 [#allocation7], 4
      %s967 = int_to_ptr.vmem [resolvable:$true] %s966
      %972 = dma.vmem_to_hbm [thread:$0]  %s967, 2048, %s3, [#allocation4], 128, 128, 8
    $region25: #{tpu_custom_call.1} parent=1 // pred_fallthru
      _
    // Predicated region
    $region26: #{tpu_custom_call.1} parent=1 // pred_check
      _
    $region27: #{tpu_custom_call.1} parent=1 // pred_check_branch
      %974 = sbr.rel (0) target = $region29
    $region28: #{tpu_custom_call.1} parent=1 // pred_region
      %s976 = ssub.s32 16, 16
      %977 = vsyncadd [#allocation9], %s976
      %s979 = sshll.u32 [#allocation8], 4
      %s980 = int_to_ptr.vmem [resolvable:$true] %s979
      %982 = dma.vmem_to_hbm [thread:$0]  %s980, 16, %s4, [#allocation9]
    $region29: #{tpu_custom_call.1} parent=1 // pred_fallthru
      _
    // Predicated region
    $region30: #{tpu_custom_call.1} parent=1 // pred_check
      _
    $region31: #{tpu_custom_call.1} parent=1 // pred_check_branch
      %984 = sbr.rel (0) target = $region33
    $region32: #{tpu_custom_call.1} parent=1 // pred_region
      %s986 = ssub.s32 16, 16
      %987 = vsyncadd [#allocation9], %s986
      %s989 = sshll.u32 [#allocation10], 4
      %s990 = int_to_ptr.vmem [resolvable:$true] %s989
      %992 = dma.vmem_to_hbm [thread:$0]  %s990, 16, %s5, [#allocation9]
    $region33: #{tpu_custom_call.1} parent=1 // pred_fallthru
      _
    // Predicated region
    $region34: #{tpu_custom_call.1} parent=1 // pred_check
      _
    $region35: #{tpu_custom_call.1} parent=1 // pred_check_branch
      %994 = sbr.rel (0) target = $region37
    $region36: #{tpu_custom_call.1} parent=1 // pred_region
      %995 = dma.done [#allocation4], 2048
    $region37: #{tpu_custom_call.1} parent=1 // pred_fallthru
      _
    // Predicated region
    $region38: #{tpu_custom_call.1} parent=1 // pred_check
      _
    $region39: #{tpu_custom_call.1} parent=1 // pred_check_branch
      %997 = sbr.rel (0) target = $region41
    $region40: #{tpu_custom_call.1} parent=1 // pred_region
      %998 = dma.done [#allocation9], 16
    $region41: #{tpu_custom_call.1} parent=1 // pred_fallthru
      _
    // Predicated region
    $region42: #{tpu_custom_call.1} parent=1 // pred_check
      _
    $region43: #{tpu_custom_call.1} parent=1 // pred_check_branch
      %1000 = sbr.rel (0) target = $region45
    $region44: #{tpu_custom_call.1} parent=1 // pred_region
      %1001 = dma.done [#allocation9], 16
    $region45: #{tpu_custom_call.1} parent=1 // pred_fallthru
      _
    %1002 = vsyncpa [#allocation3], 1
    %1003 = vsyncpa [#allocation6], 1
    %1004 = vsyncpa [#allocation4], 1
    %1005 = vsyncpa [#allocation9], 1

</llo_original>
